<compile_context>
chip_gen: v5e
topology: v5e:2x2
jax: 0.10.0
libtpu: 0.0.40
codegen_flags: <defaults>
</compile_context>

<pallas_src>
import functools

import numpy as np
import jax
import jax.numpy as jnp
from jax.experimental import pallas as pl
from jax.experimental.pallas import tpu as pltpu

LANE = 128
_COMPUTE_DTYPE = jnp.bfloat16  # MXU input dtype; accumulation stays f32


def _round_up(x, m):
    return (x + m - 1) // m * m


def _pick_tk(K_pad, pref=1024):
    """Largest K tile in {pref,512,256,128} dividing K_pad (K_pad % 128 == 0)."""
    for t in (pref, 512, 256, 128):
        if K_pad % t == 0:
            return t
    return K_pad  # unreachable when K_pad is a 128 multiple


def _pick_tm(M):
    """Row-tile size and padded row count.  tm is a multiple of 8; large
    batches get >=2 tiles so the parallel axis can shard across TensorCores."""
    M8 = _round_up(M, 8)
    if M8 <= 256:
        return M8, M8
    for tm in (512, 256, 128):
        if M8 % tm == 0:
            return tm, M8
    return 128, _round_up(M8, 128)


def _compiler_params():
    # Derive the scoped-VMEM limit from the chip (v5e/v6e: 128 MiB physical ->
    # ~96 MiB; v7x: 64 MiB -> ~48 MiB).  Tile sizes keep the working set far
    # below this, preserving double-buffering depth.
    try:
        physical = pltpu.get_tpu_info().vmem_capacity_bytes
    except Exception:  # conservative fallback (covers v7x's 64 MiB)
        physical = 64 * 1024 * 1024
    vmem_limit = int(min(physical * 3 // 4, 100 * 1024 * 1024))
    return pltpu.CompilerParams(
        dimension_semantics=("parallel", "arbitrary"),  # (M rows, K reduction)
        vmem_limit_bytes=vmem_limit,
    )


# ---------------------------------------------------------------------------
# Pallas kernels
# ---------------------------------------------------------------------------
def _fused_encode_project_kernel(x_ref, w_enc_ref, proj_ref, o_ref, feat_acc,
                                 *, norm_embed):
    """o = maybe_l2norm((x @ w_enc) @ proj) for one M tile; K reduced over
    grid axis 1.  feat_acc is an f32 VMEM accumulator for the backbone
    feature; the projection (+ optional F.normalize) runs on the last K step.
    proj is zero-padded to a lane-dense width so the L2 norm over all lanes
    equals the norm over the true embed_dim."""
    k = pl.program_id(1)

    prod = jnp.dot(x_ref[...].astype(_COMPUTE_DTYPE), w_enc_ref[...],
                   preferred_element_type=jnp.float32)

    @pl.when(k == 0)
    def _first():
        feat_acc[...] = prod            # store, no zero-fill + RMW

    @pl.when(k > 0)
    def _rest():
        feat_acc[...] += prod

    @pl.when(k == pl.num_programs(1) - 1)
    def _finalize():
        feat = feat_acc[...].astype(proj_ref.dtype)
        y = jnp.dot(feat, proj_ref[...], preferred_element_type=jnp.float32)
        if norm_embed:
            # F.normalize(dim=-1): x / max(||x||, 1e-12) == x * rsqrt(max(ssq, 1e-24))
            ssq = jnp.sum(y * y, axis=-1, keepdims=True)
            y = y * jax.lax.rsqrt(jnp.maximum(ssq, 1e-24))
        o_ref[...] = y.astype(o_ref.dtype)


def _tiled_matmul_kernel(x_ref, w_ref, o_ref):
    """o = x @ w; K tiled over grid axis 1, accumulated directly into the
    resident f32 output block (no scratch, no zero-fill)."""
    k = pl.program_id(1)
    prod = jnp.dot(x_ref[...].astype(_COMPUTE_DTYPE), w_ref[...],
                   preferred_element_type=jnp.float32)

    @pl.when(k == 0)
    def _first():
        o_ref[...] = prod

    @pl.when(k > 0)
    def _rest():
        o_ref[...] += prod


# ---------------------------------------------------------------------------
# pallas_call wrappers
# ---------------------------------------------------------------------------
def fused_encode_project(x, w_enc, proj_pad, *, norm_embed):
    """maybe_l2norm((x @ w_enc) @ proj_pad) in ONE (M,K)-tiled pallas_call.

    x:        [M, K]      activations (any float dtype; cast to bf16 in-kernel)
    w_enc:    [K, W]      stand-in backbone weight, bf16, K/W % 128 == 0
    proj_pad: [W, Npad]   projection, bf16, zero-padded so Npad % 128 == 0
    returns   [M, Npad]   f32 (caller slices columns to embed_dim)
    """
    M, K = x.shape
    Kw, W = w_enc.shape
    Wp, Npad = proj_pad.shape
    assert K == Kw and W == Wp
    assert K % LANE == 0 and W % LANE == 0 and Npad % LANE == 0
    assert w_enc.dtype == _COMPUTE_DTYPE and proj_pad.dtype == _COMPUTE_DTYPE

    tm, M_pad = _pick_tm(M)
    if M_pad != M:
        x = jnp.pad(x, ((0, M_pad - M), (0, 0)))
    tk = _pick_tk(K)
    grid = (M_pad // tm, K // tk)

    cost = pl.CostEstimate(
        flops=2 * M_pad * K * W + 2 * M_pad * W * Npad,
        transcendentals=0,
        bytes_accessed=(M_pad * K * x.dtype.itemsize + K * W * 2
                        + W * Npad * 2 + M_pad * Npad * 4),
    )
    kernel = functools.partial(_fused_encode_project_kernel,
                               norm_embed=norm_embed)
    out = pl.pallas_call(
        kernel,
        out_shape=jax.ShapeDtypeStruct((M_pad, Npad), jnp.float32),
        grid_spec=pltpu.PrefetchScalarGridSpec(
            num_scalar_prefetch=0,
            grid=grid,
            in_specs=[
                pl.BlockSpec((tm, tk), lambda i, k: (i, k)),
                pl.BlockSpec((tk, W), lambda i, k: (k, 0)),
                pl.BlockSpec((W, Npad), lambda i, k: (0, 0)),
            ],
            out_specs=pl.BlockSpec((tm, Npad), lambda i, k: (i, 0)),
            scratch_shapes=[pltpu.VMEM((tm, W), jnp.float32)],
        ),
        compiler_params=_compiler_params(),
        cost_estimate=cost,
    )(x, w_enc, proj_pad)
    return out[:M]


def tiled_matmul(x, w):
    """x @ w (f32 out), (M,K)-tiled.  Used for the un-projected
    encode_image(apply_project=False) path only."""
    M, K = x.shape
    Kw, N = w.shape
    assert K == Kw and K % LANE == 0 and N % LANE == 0
    assert w.dtype == _COMPUTE_DTYPE

    tm, M_pad = _pick_tm(M)
    if M_pad != M:
        x = jnp.pad(x, ((0, M_pad - M), (0, 0)))
    tk = _pick_tk(K)
    grid = (M_pad // tm, K // tk)

    cost = pl.CostEstimate(
        flops=2 * M_pad * K * N,
        transcendentals=0,
        bytes_accessed=(M_pad * K * x.dtype.itemsize + K * N * 2
                        + M_pad * N * 4),
    )
    out = pl.pallas_call(
        _tiled_matmul_kernel,
        out_shape=jax.ShapeDtypeStruct((M_pad, N), jnp.float32),
        grid_spec=pltpu.PrefetchScalarGridSpec(
            num_scalar_prefetch=0,
            grid=grid,
            in_specs=[
                pl.BlockSpec((tm, tk), lambda i, k: (i, k)),
                pl.BlockSpec((tk, N), lambda i, k: (k, 0)),
            ],
            out_specs=pl.BlockSpec((tm, N), lambda i, k: (i, 0)),
        ),
        compiler_params=_compiler_params(),
        cost_estimate=cost,
    )(x, w)
    return out[:M]


# ---------------------------------------------------------------------------
# CLIP_HF in JAX (parameters + forward)
# ---------------------------------------------------------------------------
class CLIPHFPallas:
    def __init__(self, key, embed_dim, vision_width, text_width, image_flat_dim,
                 vocab_size, temperature_init=0.07):
        k1, k2, k3, k4, k5 = jax.random.split(key, 5)
        self.embed_dim = embed_dim
        self.vision_width = vision_width
        self.text_width = text_width
        self.image_flat_dim = image_flat_dim
        self.embed_dim_pad = _round_up(embed_dim, LANE)
        self.vision_width_pad = _round_up(vision_width, LANE)
        self.text_width_pad = _round_up(text_width, LANE)
        self.image_flat_dim_pad = _round_up(image_flat_dim, LANE)

        # ---- stand-in backbones (external nn.Modules in the original) -------
        # Stored bf16 and zero-padded to lane-dense (128-multiple) dims so all
        # MXU blocks are unmasked full-lane; padded rows/cols contribute zero.
        w_vis = (jax.random.normal(k1, (image_flat_dim, vision_width), jnp.float32)
                 * image_flat_dim ** (-0.5))
        self.w_vis_enc = jnp.pad(
            w_vis, ((0, self.image_flat_dim_pad - image_flat_dim),
                    (0, self.vision_width_pad - vision_width))
        ).astype(_COMPUTE_DTYPE)

        tok = jax.random.normal(k2, (vocab_size, text_width), jnp.float32) * 0.02
        self.token_embed = jnp.pad(
            tok, ((0, 0), (0, self.text_width_pad - text_width))
        ).astype(_COMPUTE_DTYPE)

        w_txt = (jax.random.normal(k3, (text_width, text_width), jnp.float32)
                 * text_width ** (-0.5))
        self.w_txt_enc = jnp.pad(
            w_txt, ((0, self.text_width_pad - text_width),
                    (0, self.text_width_pad - text_width))
        ).astype(_COMPUTE_DTYPE)

        # ---- CLIP_HF parameters (projection='default') ----------------------
        self.image_projection = (
            jax.random.normal(k4, (vision_width, embed_dim), jnp.float32)
            * vision_width ** (-0.5))
        self.text_projection = (
            jax.random.normal(k5, (text_width, embed_dim), jnp.float32)
            * text_width ** (-0.5))
        # lane-dense zero-padded bf16 copies used inside the kernels
        self._image_projection_pad = jnp.pad(
            self.image_projection,
            ((0, self.vision_width_pad - vision_width),
             (0, self.embed_dim_pad - embed_dim))).astype(_COMPUTE_DTYPE)
        self._text_projection_pad = jnp.pad(
            self.text_projection,
            ((0, self.text_width_pad - text_width),
             (0, self.embed_dim_pad - embed_dim))).astype(_COMPUTE_DTYPE)

        # TODO(synk): the reference CLIP_HF does not clamp logit_scale; neither do we.
        self.logit_scale = jnp.asarray(np.log(1.0 / temperature_init), jnp.float32)
        self.text_use_cls_token = True
        self.text_is_regressive = False

    # -- encode_image ------------------------------------------------------
    def encode_image(self, image, apply_project=True, norm_embed=False):
        B = image.shape[0]
        x_flat = image.reshape(B, -1)                      # NCHW flatten (glue)
        pad_k = self.image_flat_dim_pad - x_flat.shape[1]
        if pad_k:
            x_flat = jnp.pad(x_flat, ((0, 0), (0, pad_k)))
        if not apply_project:
            out = tiled_matmul(x_flat, self.w_vis_enc)     # stand-in visual() only
            return out[:, :self.vision_width]
        out = fused_encode_project(x_flat, self.w_vis_enc,
                                   self._image_projection_pad,
                                   norm_embed=norm_embed)
        return out[:, :self.embed_dim]

    # -- encode_text -------------------------------------------------------
    def encode_text(self, text, attention_mask=None, norm_embed=False):
        # text_use_cls_token=True -> last_hidden_state[:, 0, :] feeds the
        # projection, so only the CLS row is gathered/encoded (S-fold cheaper).
        # This CLS-first slicing is exact only because the stand-in text
        # encoder is a per-token linear.
        # TODO(synk): a real HF attention backbone must process the full
        # sequence before slicing the CLS token.
        cls_ids = text[:, 0]
        cls_emb = jnp.take(self.token_embed, cls_ids, axis=0)  # [B, text_width_pad]
        out = fused_encode_project(cls_emb, self.w_txt_enc,
                                   self._text_projection_pad,
                                   norm_embed=norm_embed)
        return out[:, :self.embed_dim]

    # -- forward -----------------------------------------------------------
    def __call__(self, image, text, mask=None, norm_embed=False):
        image_embed = self.encode_image(image, apply_project=True,
                                        norm_embed=norm_embed)
        text_embed = self.encode_text(text, attention_mask=mask,
                                      norm_embed=norm_embed)
        return {
            "image_embed": image_embed,
            "text_embed": text_embed,
            "logit_scale": jnp.exp(self.logit_scale),
        }


# ---------------------------------------------------------------------------
# Pure-JAX reference (mirrors the kernels' bf16 casts) for correctness check
# ---------------------------------------------------------------------------
def _ref_forward(model, image, text, norm_embed):
    B = image.shape[0]
    xf = image.reshape(B, -1)
    pad_k = model.image_flat_dim_pad - xf.shape[1]
    if pad_k:
        xf = jnp.pad(xf, ((0, 0), (0, pad_k)))
    xf = xf.astype(_COMPUTE_DTYPE).astype(jnp.float32)
    feat = xf @ model.w_vis_enc.astype(jnp.float32)
    feat = feat.astype(_COMPUTE_DTYPE).astype(jnp.float32)
    img = (feat @ model._image_projection_pad.astype(jnp.float32))[:, :model.embed_dim]

    cls_emb = jnp.take(model.token_embed, text[:, 0], axis=0).astype(jnp.float32)
    tfeat = cls_emb @ model.w_txt_enc.astype(jnp.float32)
    tfeat = tfeat.astype(_COMPUTE_DTYPE).astype(jnp.float32)
    txt = (tfeat @ model._text_projection_pad.astype(jnp.float32))[:, :model.embed_dim]

    if norm_embed:
        img = img / jnp.maximum(jnp.linalg.norm(img, axis=-1, keepdims=True), 1e-12)
        txt = txt / jnp.maximum(jnp.linalg.norm(txt, axis=-1, keepdims=True), 1e-12)
    return img, txt


# ---------------------------------------------------------------------------
# Demo
# ---------------------------------------------------------------------------
if __name__ == "__main__":
    key = jax.random.PRNGKey(0)
    k_img, k_txt, k_param = jax.random.split(key, 3)

    # small shapes consistent with the module
    B, C, H, Wimg = 2, 4, 16, 16
    seq_len = 8
    vocab = 64
    vision_width = 32
    text_width = 32
    embed_dim = 16

    image = jax.random.normal(k_img, (B, C, H, Wimg), jnp.float32)       # NCHW
    text = jax.random.randint(k_txt, (B, seq_len), 0, vocab, jnp.int32)  # token ids

    model = CLIPHFPallas(
        k_param,
        embed_dim=embed_dim,
        vision_width=vision_width,
        text_width=text_width,
        image_flat_dim=C * H * Wimg,
        vocab_size=vocab,
        temperature_init=0.07,
    )

    out = model(image, text, norm_embed=True)
    jax.block_until_ready(out)

    assert out["image_embed"].shape == (B, embed_dim)
    assert out["text_embed"].shape == (B, embed_dim)
    assert out["logit_scale"].shape == ()

    # with norm_embed=True rows must be unit-norm
    np.testing.assert_allclose(
        np.linalg.norm(np.asarray(out["image_embed"]), axis=-1), 1.0, rtol=1e-4)
    np.testing.assert_allclose(
        np.linalg.norm(np.asarray(out["text_embed"]), axis=-1), 1.0, rtol=1e-4)

    # compare against a pure-JAX reference (loose tolerance: bf16 MXU inputs)
    ref_img, ref_txt = _ref_forward(model, image, text, norm_embed=True)
    np.testing.assert_allclose(np.asarray(out["image_embed"]), np.asarray(ref_img),
                               rtol=2e-2, atol=2e-2)
    np.testing.assert_allclose(np.asarray(out["text_embed"]), np.asarray(ref_txt),
                               rtol=2e-2, atol=2e-2)

    # also run the norm_embed=False path and the apply_project=False path once
    out2 = model(image, text, norm_embed=False)
    feat_only = model.encode_image(image, apply_project=False)
    jax.block_until_ready((out2, feat_only))
    assert feat_only.shape == (B, vision_width)

    ref_img2, ref_txt2 = _ref_forward(model, image, text, norm_embed=False)
    np.testing.assert_allclose(np.asarray(out2["image_embed"]), np.asarray(ref_img2),
                               rtol=2e-2, atol=2e-2)
    np.testing.assert_allclose(np.asarray(out2["text_embed"]), np.asarray(ref_txt2),
                               rtol=2e-2, atol=2e-2)

    print("KERNEL_OK")
</pallas_src>

<mosaic_0001>
module attributes {stable_mosaic.version = 11 : i64} {
  func.func @_fused_encode_project_kernel(%arg0: i32, %arg1: i32, %arg2: memref<8x1024xf32, #tpu.memory_space<vmem>>, %arg3: memref<1024x128xbf16, #tpu.memory_space<vmem>>, %arg4: memref<128x128xbf16, #tpu.memory_space<vmem>>, %arg5: memref<8x128xf32, #tpu.memory_space<vmem>>, %arg6: memref<8x128xf32, #tpu.memory_space<vmem>>) attributes {dimension_semantics = [#tpu.dimension_semantics<parallel>, #tpu.dimension_semantics<arbitrary>], iteration_bounds = array<i64: 1, 1>, scalar_prefetch = 0 : i64, scratch_operands = 1 : i64, tpu.core_type = #tpu.core_type<tc>, window_params = [{transform_indices = @transform_0, window_bounds = array<i64: 8, 1024>}, {transform_indices = @transform_1, window_bounds = array<i64: 1024, 128>}, {pipeline_mode = #tpu.pipeline_mode<synchronous>, transform_indices = @transform_2, window_bounds = array<i64: 128, 128>}, {transform_indices = @transform_3, window_bounds = array<i64: 8, 128>}]} {
    %c0 = arith.constant 0 : index
    %c0_0 = arith.constant 0 : index
    %0 = vector.load %arg2[%c0, %c0_0] : memref<8x1024xf32, #tpu.memory_space<vmem>>, vector<8x1024xf32>
    %1 = arith.truncf %0 : vector<8x1024xf32> to vector<8x1024xbf16>
    %c0_1 = arith.constant 0 : index
    %c0_2 = arith.constant 0 : index
    %2 = vector.load %arg3[%c0_1, %c0_2] : memref<1024x128xbf16, #tpu.memory_space<vmem>>, vector<1024x128xbf16>
    %cst = arith.constant dense<0.000000e+00> : vector<8x128xf32>
    %3 = tpu.matmul %1, %2, %cst {dimension_numbers = #tpu.dot_dimension_numbers<[1], [0], [0], [1], [0, 0, 1, 1], [], []>} : vector<8x1024xbf16>, vector<1024x128xbf16>, vector<8x128xf32> -> vector<8x128xf32>
    %c0_i32 = arith.constant 0 : i32
    %4 = arith.cmpi eq, %arg1, %c0_i32 : i32
    %5 = arith.extui %4 : i1 to i32
    %c0_i32_3 = arith.constant 0 : i32
    %6 = arith.cmpi ne, %5, %c0_i32_3 : i32
    scf.if %6 {
      %c0_8 = arith.constant 0 : index
      %c0_9 = arith.constant 0 : index
      %13 = vector.load %arg6[%c0_8, %c0_9] : memref<8x128xf32, #tpu.memory_space<vmem>>, vector<8x128xf32>
      tpu.vector_store %arg6[%c0_8, %c0_9], %3 {strides = array<i32>} : memref<8x128xf32, #tpu.memory_space<vmem>>, vector<8x128xf32>,
    } else {
    }
    %c0_i32_4 = arith.constant 0 : i32
    %7 = arith.cmpi sgt, %arg1, %c0_i32_4 : i32
    %8 = arith.extui %7 : i1 to i32
    %c0_i32_5 = arith.constant 0 : i32
    %9 = arith.cmpi ne, %8, %c0_i32_5 : i32
    scf.if %9 {
      %c0_8 = arith.constant 0 : index
      %c0_9 = arith.constant 0 : index
      %13 = vector.load %arg6[%c0_8, %c0_9] : memref<8x128xf32, #tpu.memory_space<vmem>>, vector<8x128xf32>
      %14 = arith.addf %13, %3 : vector<8x128xf32>
      %c0_10 = arith.constant 0 : index
      %c0_11 = arith.constant 0 : index
      %15 = vector.load %arg6[%c0_10, %c0_11] : memref<8x128xf32, #tpu.memory_space<vmem>>, vector<8x128xf32>
      tpu.vector_store %arg6[%c0_10, %c0_11], %14 {strides = array<i32>} : memref<8x128xf32, #tpu.memory_space<vmem>>, vector<8x128xf32>,
    } else {
    }
    %c0_i32_6 = arith.constant 0 : i32
    %10 = arith.cmpi eq, %arg1, %c0_i32_6 : i32
    %11 = arith.extui %10 : i1 to i32
    %c0_i32_7 = arith.constant 0 : i32
    %12 = arith.cmpi ne, %11, %c0_i32_7 : i32
    scf.if %12 {
      %c0_8 = arith.constant 0 : index
      %c0_9 = arith.constant 0 : index
      %13 = vector.load %arg6[%c0_8, %c0_9] : memref<8x128xf32, #tpu.memory_space<vmem>>, vector<8x128xf32>
      %14 = arith.truncf %13 : vector<8x128xf32> to vector<8x128xbf16>
      %c0_10 = arith.constant 0 : index
      %c0_11 = arith.constant 0 : index
      %15 = vector.load %arg4[%c0_10, %c0_11] : memref<128x128xbf16, #tpu.memory_space<vmem>>, vector<128x128xbf16>
      %cst_12 = arith.constant dense<0.000000e+00> : vector<8x128xf32>
      %16 = tpu.matmul %14, %15, %cst_12 {dimension_numbers = #tpu.dot_dimension_numbers<[1], [0], [0], [1], [0, 0, 1, 1], [], []>} : vector<8x128xbf16>, vector<128x128xbf16>, vector<8x128xf32> -> vector<8x128xf32>
      %17 = arith.mulf %16, %16 : vector<8x128xf32>
      %cst_13 = arith.constant dense<0.000000e+00> : vector<8xf32>
      %18 = vector.multi_reduction <add>, %17, %cst_13 [1] : vector<8x128xf32> to vector<8xf32>
      %19 = vector.shape_cast %18 : vector<8xf32> to vector<8x1xf32>
      %cst_14 = arith.constant 1.000000e-24 : f32
      %20 = vector.broadcast %cst_14 : f32 to vector<8x1xf32>
      %21 = arith.maximumf %19, %20 : vector<8x1xf32>
      %22 = math.rsqrt %21 : vector<8x1xf32>
      %23 = vector.broadcast %22 : vector<8x1xf32> to vector<8x128xf32>
      %24 = arith.mulf %16, %23 : vector<8x128xf32>
      %c0_15 = arith.constant 0 : index
      %c0_16 = arith.constant 0 : index
      %25 = vector.load %arg5[%c0_15, %c0_16] : memref<8x128xf32, #tpu.memory_space<vmem>>, vector<8x128xf32>
      tpu.vector_store %arg5[%c0_15, %c0_16], %24 {strides = array<i32>} : memref<8x128xf32, #tpu.memory_space<vmem>>, vector<8x128xf32>,
    } else {
    }
    return
  }
  func.func @transform_0(%arg0: i32, %arg1: i32) -> (i32, i32) {
    %c0_i32 = arith.constant 0 : i32
    return %arg0, %arg1 : i32, i32
  }
  func.func @transform_1(%arg0: i32, %arg1: i32) -> (i32, i32) {
    %c0_i32 = arith.constant 0 : i32
    %c0_i32_0 = arith.constant 0 : i32
    return %arg1, %c0_i32 : i32, i32
  }
  func.func @transform_2(%arg0: i32, %arg1: i32) -> (i32, i32) {
    %c0_i32 = arith.constant 0 : i32
    %c0_i32_0 = arith.constant 0 : i32
    %c0_i32_1 = arith.constant 0 : i32
    return %c0_i32, %c0_i32_0 : i32, i32
  }
  func.func @transform_3(%arg0: i32, %arg1: i32) -> (i32, i32) {
    %c0_i32 = arith.constant 0 : i32
    %c0_i32_0 = arith.constant 0 : i32
    return %arg0, %c0_i32 : i32, i32
  }
}

</mosaic_0001>

<llo_original>
// kernel: tpu_custom_call.1
$region0: #{tpu_custom_call.1}
  #allocation0 [shape = 'u32[]', space=smem, size = 0x4, offset = 0x4, fixed_abs, tag = 'smem constant byte address 0x4 - core index']
  #allocation1 [shape = 'u32[72,128]{1,0:T(1,128)}', space=vmem, size = 0x9000, scoped, tag = 'internal scratch']
  #allocation2 [shape = 'f32[8,128]{1,0:T(8,128)}', space=vmem, size = 0x1000, scoped, tag = 'scratch operand']
  %s0 = inlined_call_operand.hbm [shape: f32[8,1024], index: 0, kind: input, shape index: {}]
  %s1 = inlined_call_operand.hbm [shape: bf16[1024,128], index: 1, kind: input, shape index: {}]
  %s2 = inlined_call_operand.hbm [shape: bf16[128,128], index: 2, kind: input, shape index: {}]
  %s3 = inlined_call_operand.hbm [shape: f32[8,128], index: 3, kind: output, shape index: {}]
  %s4 = sld [smem:[#allocation0]]
  $region46: #{tpu_custom_call.1} parent=0
    _
  %s6 = ssub.s32 1, %s4
  %s7 = scalar_select 0, %s6, %s4
  $region1: #{tpu_custom_call.1} parent=0
    #allocation3 [shape = 'u8[32768]{0}', space=vmem, size = 0x8000, scoped, tag = 'input window, operand 0, single buffered']
    #allocation4 [shape = 's32[1]{0}', space=sflag, size = 0x4, scoped, tag = 'scoped memory for tpu_custom_call.1']
    #allocation5 [shape = 's32[1]{0}', space=sflag, size = 0x4, scoped, tag = 'scoped memory for tpu_custom_call.1']
    #allocation6 [shape = 'u8[262144]{0}', space=vmem, size = 0x40000, scoped, tag = 'input window, operand 1, single buffered']
    #allocation7 [shape = 's32[1]{0}', space=sflag, size = 0x4, scoped, tag = 'scoped memory for tpu_custom_call.1']
    #allocation8 [shape = 'u8[32768]{0}', space=vmem, size = 0x8000, scoped, tag = 'input window, operand 2, single buffered']
    #allocation9 [shape = 'u8[4096]{0}', space=vmem, size = 0x1000, scoped, tag = 'output window, operand 0, single buffered']
    %8 = vsyncpa [#allocation4], 0
    %9 = vsyncpa [#allocation7], 0
    %10 = vsyncpa [#allocation5], 0
    // Predicated region
    $region2: #{tpu_custom_call.1} parent=1 // pred_check
      _
    $region3: #{tpu_custom_call.1} parent=1 // pred_check_branch
      %12 = sbr.rel (0) target = $region5
    $region4: #{tpu_custom_call.1} parent=1 // pred_region
      %14 = vsyncadd [#allocation4], 0
      %s16 = sshll.u32 %s0, 4
      %s17 = int_to_ptr.hbm [resolvable:$true] %s16
      %s18 = sshll.u32 [#allocation3], 4
      %s19 = int_to_ptr.vmem [resolvable:$true] %s18
      %21 = dma.hbm_to_vmem [thread:$0]  %s17, 1024, %s19, [#allocation4]
    $region5: #{tpu_custom_call.1} parent=1 // pred_fallthru
      _
    // Predicated region
    $region6: #{tpu_custom_call.1} parent=1 // pred_check
      _
    $region7: #{tpu_custom_call.1} parent=1 // pred_check_branch
      %23 = sbr.rel (0) target = $region9
    $region8: #{tpu_custom_call.1} parent=1 // pred_region
      %25 = vsyncadd [#allocation7], 0
      %s26 = sshll.u32 %s1, 4
      %s27 = int_to_ptr.hbm [resolvable:$true] %s26
      %s28 = sshll.u32 [#allocation6], 4
      %s29 = int_to_ptr.vmem [resolvable:$true] %s28
      %34 = dma.hbm_to_vmem [thread:$0]  %s27, 8192, %s29, [#allocation7], 64, 64, 4
    $region9: #{tpu_custom_call.1} parent=1 // pred_fallthru
      _
    // Predicated region
    $region10: #{tpu_custom_call.1} parent=1 // pred_check
      _
    $region11: #{tpu_custom_call.1} parent=1 // pred_check_branch
      %36 = sbr.rel (0) target = $region13
    $region12: #{tpu_custom_call.1} parent=1 // pred_region
      %38 = vsyncadd [#allocation7], 0
      %s39 = sshll.u32 %s2, 4
      %s40 = int_to_ptr.hbm [resolvable:$true] %s39
      %s41 = sshll.u32 [#allocation8], 4
      %s42 = int_to_ptr.vmem [resolvable:$true] %s41
      %47 = dma.hbm_to_vmem [thread:$0]  %s40, 1024, %s42, [#allocation7], 64, 64, 4
    $region13: #{tpu_custom_call.1} parent=1 // pred_fallthru
      _
    // Predicated region
    $region14: #{tpu_custom_call.1} parent=1 // pred_check
      _
    $region15: #{tpu_custom_call.1} parent=1 // pred_check_branch
      %49 = sbr.rel (0) target = $region17
    $region16: #{tpu_custom_call.1} parent=1 // pred_region
      %51 = dma.done [#allocation4], 1024
    $region17: #{tpu_custom_call.1} parent=1 // pred_fallthru
      _
    // Predicated region
    $region18: #{tpu_custom_call.1} parent=1 // pred_check
      _
    $region19: #{tpu_custom_call.1} parent=1 // pred_check_branch
      %53 = sbr.rel (0) target = $region21
    $region20: #{tpu_custom_call.1} parent=1 // pred_region
      %55 = dma.done [#allocation7], 8192
    $region21: #{tpu_custom_call.1} parent=1 // pred_fallthru
      _
    // Predicated region
    $region22: #{tpu_custom_call.1} parent=1 // pred_check
      _
    $region23: #{tpu_custom_call.1} parent=1 // pred_check_branch
      %57 = sbr.rel (0) target = $region25
    $region24: #{tpu_custom_call.1} parent=1 // pred_region
      %59 = dma.done [#allocation7], 1024
    $region25: #{tpu_custom_call.1} parent=1 // pred_fallthru
      _
    %v60 = vld [vmem:[#allocation3] sm:$0xff]
    %v61 = vld [vmem:[#allocation3 + $0x8] sm:$0xff]
    %v62 = vld [vmem:[#allocation3 + $0x10] sm:$0xff]
    %v63 = vld [vmem:[#allocation3 + $0x18] sm:$0xff]
    %v64 = vld [vmem:[#allocation3 + $0x20] sm:$0xff]
    %v65 = vld [vmem:[#allocation3 + $0x28] sm:$0xff]
    %v66 = vld [vmem:[#allocation3 + $0x30] sm:$0xff]
    %v67 = vld [vmem:[#allocation3 + $0x38] sm:$0xff]
    %v68 = vpack.c.bf16 %v60, %v60
    %v69 = vpack.c.bf16 %v61, %v61
    %v70 = vpack.c.bf16 %v62, %v62
    %v71 = vpack.c.bf16 %v63, %v63
    %v72 = vpack.c.bf16 %v64, %v64
    %v73 = vpack.c.bf16 %v65, %v65
    %v74 = vpack.c.bf16 %v66, %v66
    %v75 = vpack.c.bf16 %v67, %v67
    %v76 = vld [vmem:[#allocation6] sm:$0xf]
    %v77 = vld [vmem:[#allocation6 + $0x4] sm:$0xf]
    %v78 = vld [vmem:[#allocation6 + $0x8] sm:$0xf]
    %v79 = vld [vmem:[#allocation6 + $0xc] sm:$0xf]
    %v80 = vld [vmem:[#allocation6 + $0x10] sm:$0xf]
    %v81 = vld [vmem:[#allocation6 + $0x14] sm:$0xf]
    %v82 = vld [vmem:[#allocation6 + $0x18] sm:$0xf]
    %v83 = vld [vmem:[#allocation6 + $0x1c] sm:$0xf]
    %v84 = vld [vmem:[#allocation6 + $0x20] sm:$0xf]
    %v85 = vld [vmem:[#allocation6 + $0x24] sm:$0xf]
    %v86 = vld [vmem:[#allocation6 + $0x28] sm:$0xf]
    %v87 = vld [vmem:[#allocation6 + $0x2c] sm:$0xf]
    %v88 = vld [vmem:[#allocation6 + $0x30] sm:$0xf]
    %v89 = vld [vmem:[#allocation6 + $0x34] sm:$0xf]
    %v90 = vld [vmem:[#allocation6 + $0x38] sm:$0xf]
    %v91 = vld [vmem:[#allocation6 + $0x3c] sm:$0xf]
    %v92 = vld [vmem:[#allocation6 + $0x40] sm:$0xf]
    %v93 = vld [vmem:[#allocation6 + $0x44] sm:$0xf]
    %v94 = vld [vmem:[#allocation6 + $0x48] sm:$0xf]
    %v95 = vld [vmem:[#allocation6 + $0x4c] sm:$0xf]
    %v96 = vld [vmem:[#allocation6 + $0x50] sm:$0xf]
    %v97 = vld [vmem:[#allocation6 + $0x54] sm:$0xf]
    %v98 = vld [vmem:[#allocation6 + $0x58] sm:$0xf]
    %v99 = vld [vmem:[#allocation6 + $0x5c] sm:$0xf]
    %v100 = vld [vmem:[#allocation6 + $0x60] sm:$0xf]
    %v101 = vld [vmem:[#allocation6 + $0x64] sm:$0xf]
    %v102 = vld [vmem:[#allocation6 + $0x68] sm:$0xf]
    %v103 = vld [vmem:[#allocation6 + $0x6c] sm:$0xf]
    %v104 = vld [vmem:[#allocation6 + $0x70] sm:$0xf]
    %v105 = vld [vmem:[#allocation6 + $0x74] sm:$0xf]
    %v106 = vld [vmem:[#allocation6 + $0x78] sm:$0xf]
    %v107 = vld [vmem:[#allocation6 + $0x7c] sm:$0xf]
    %v108 = vld [vmem:[#allocation6 + $0x80] sm:$0xf]
    %v109 = vld [vmem:[#allocation6 + $0x84] sm:$0xf]
    %v110 = vld [vmem:[#allocation6 + $0x88] sm:$0xf]
    %v111 = vld [vmem:[#allocation6 + $0x8c] sm:$0xf]
    %v112 = vld [vmem:[#allocation6 + $0x90] sm:$0xf]
    %v113 = vld [vmem:[#allocation6 + $0x94] sm:$0xf]
    %v114 = vld [vmem:[#allocation6 + $0x98] sm:$0xf]
    %v115 = vld [vmem:[#allocation6 + $0x9c] sm:$0xf]
    %v116 = vld [vmem:[#allocation6 + $0xa0] sm:$0xf]
    %v117 = vld [vmem:[#allocation6 + $0xa4] sm:$0xf]
    %v118 = vld [vmem:[#allocation6 + $0xa8] sm:$0xf]
    %v119 = vld [vmem:[#allocation6 + $0xac] sm:$0xf]
    %v120 = vld [vmem:[#allocation6 + $0xb0] sm:$0xf]
    %v121 = vld [vmem:[#allocation6 + $0xb4] sm:$0xf]
    %v122 = vld [vmem:[#allocation6 + $0xb8] sm:$0xf]
    %v123 = vld [vmem:[#allocation6 + $0xbc] sm:$0xf]
    %v124 = vld [vmem:[#allocation6 + $0xc0] sm:$0xf]
    %v125 = vld [vmem:[#allocation6 + $0xc4] sm:$0xf]
    %v126 = vld [vmem:[#allocation6 + $0xc8] sm:$0xf]
    %v127 = vld [vmem:[#allocation6 + $0xcc] sm:$0xf]
    %v128 = vld [vmem:[#allocation6 + $0xd0] sm:$0xf]
    %v129 = vld [vmem:[#allocation6 + $0xd4] sm:$0xf]
    %v130 = vld [vmem:[#allocation6 + $0xd8] sm:$0xf]
    %v131 = vld [vmem:[#allocation6 + $0xdc] sm:$0xf]
    %v132 = vld [vmem:[#allocation6 + $0xe0] sm:$0xf]
    %v133 = vld [vmem:[#allocation6 + $0xe4] sm:$0xf]
    %v134 = vld [vmem:[#allocation6 + $0xe8] sm:$0xf]
    %v135 = vld [vmem:[#allocation6 + $0xec] sm:$0xf]
    %v136 = vld [vmem:[#allocation6 + $0xf0] sm:$0xf]
    %v137 = vld [vmem:[#allocation6 + $0xf4] sm:$0xf]
    %v138 = vld [vmem:[#allocation6 + $0xf8] sm:$0xf]
    %v139 = vld [vmem:[#allocation6 + $0xfc] sm:$0xf]
    %v140 = vld [vmem:[#allocation6 + $0x100] sm:$0xf]
    %v141 = vld [vmem:[#allocation6 + $0x104] sm:$0xf]
    %v142 = vld [vmem:[#allocation6 + $0x108] sm:$0xf]
    %v143 = vld [vmem:[#allocation6 + $0x10c] sm:$0xf]
    %v144 = vld [vmem:[#allocation6 + $0x110] sm:$0xf]
    %v145 = vld [vmem:[#allocation6 + $0x114] sm:$0xf]
    %v146 = vld [vmem:[#allocation6 + $0x118] sm:$0xf]
    %v147 = vld [vmem:[#allocation6 + $0x11c] sm:$0xf]
    %v148 = vld [vmem:[#allocation6 + $0x120] sm:$0xf]
    %v149 = vld [vmem:[#allocation6 + $0x124] sm:$0xf]
    %v150 = vld [vmem:[#allocation6 + $0x128] sm:$0xf]
    %v151 = vld [vmem:[#allocation6 + $0x12c] sm:$0xf]
    %v152 = vld [vmem:[#allocation6 + $0x130] sm:$0xf]
    %v153 = vld [vmem:[#allocation6 + $0x134] sm:$0xf]
    %v154 = vld [vmem:[#allocation6 + $0x138] sm:$0xf]
    %v155 = vld [vmem:[#allocation6 + $0x13c] sm:$0xf]
    %v156 = vld [vmem:[#allocation6 + $0x140] sm:$0xf]
    %v157 = vld [vmem:[#allocation6 + $0x144] sm:$0xf]
    %v158 = vld [vmem:[#allocation6 + $0x148] sm:$0xf]
    %v159 = vld [vmem:[#allocation6 + $0x14c] sm:$0xf]
    %v160 = vld [vmem:[#allocation6 + $0x150] sm:$0xf]
    %v161 = vld [vmem:[#allocation6 + $0x154] sm:$0xf]
    %v162 = vld [vmem:[#allocation6 + $0x158] sm:$0xf]
    %v163 = vld [vmem:[#allocation6 + $0x15c] sm:$0xf]
    %v164 = vld [vmem:[#allocation6 + $0x160] sm:$0xf]
    %v165 = vld [vmem:[#allocation6 + $0x164] sm:$0xf]
    %v166 = vld [vmem:[#allocation6 + $0x168] sm:$0xf]
    %v167 = vld [vmem:[#allocation6 + $0x16c] sm:$0xf]
    %v168 = vld [vmem:[#allocation6 + $0x170] sm:$0xf]
    %v169 = vld [vmem:[#allocation6 + $0x174] sm:$0xf]
    %v170 = vld [vmem:[#allocation6 + $0x178] sm:$0xf]
    %v171 = vld [vmem:[#allocation6 + $0x17c] sm:$0xf]
    %v172 = vld [vmem:[#allocation6 + $0x180] sm:$0xf]
    %v173 = vld [vmem:[#allocation6 + $0x184] sm:$0xf]
    %v174 = vld [vmem:[#allocation6 + $0x188] sm:$0xf]
    %v175 = vld [vmem:[#allocation6 + $0x18c] sm:$0xf]
    %v176 = vld [vmem:[#allocation6 + $0x190] sm:$0xf]
    %v177 = vld [vmem:[#allocation6 + $0x194] sm:$0xf]
    %v178 = vld [vmem:[#allocation6 + $0x198] sm:$0xf]
    %v179 = vld [vmem:[#allocation6 + $0x19c] sm:$0xf]
    %v180 = vld [vmem:[#allocation6 + $0x1a0] sm:$0xf]
    %v181 = vld [vmem:[#allocation6 + $0x1a4] sm:$0xf]
    %v182 = vld [vmem:[#allocation6 + $0x1a8] sm:$0xf]
    %v183 = vld [vmem:[#allocation6 + $0x1ac] sm:$0xf]
    %v184 = vld [vmem:[#allocation6 + $0x1b0] sm:$0xf]
    %v185 = vld [vmem:[#allocation6 + $0x1b4] sm:$0xf]
    %v186 = vld [vmem:[#allocation6 + $0x1b8] sm:$0xf]
    %v187 = vld [vmem:[#allocation6 + $0x1bc] sm:$0xf]
    %v188 = vld [vmem:[#allocation6 + $0x1c0] sm:$0xf]
    %v189 = vld [vmem:[#allocation6 + $0x1c4] sm:$0xf]
    %v190 = vld [vmem:[#allocation6 + $0x1c8] sm:$0xf]
    %v191 = vld [vmem:[#allocation6 + $0x1cc] sm:$0xf]
    %v192 = vld [vmem:[#allocation6 + $0x1d0] sm:$0xf]
    %v193 = vld [vmem:[#allocation6 + $0x1d4] sm:$0xf]
    %v194 = vld [vmem:[#allocation6 + $0x1d8] sm:$0xf]
    %v195 = vld [vmem:[#allocation6 + $0x1dc] sm:$0xf]
    %v196 = vld [vmem:[#allocation6 + $0x1e0] sm:$0xf]
    %v197 = vld [vmem:[#allocation6 + $0x1e4] sm:$0xf]
    %v198 = vld [vmem:[#allocation6 + $0x1e8] sm:$0xf]
    %v199 = vld [vmem:[#allocation6 + $0x1ec] sm:$0xf]
    %v200 = vld [vmem:[#allocation6 + $0x1f0] sm:$0xf]
    %v201 = vld [vmem:[#allocation6 + $0x1f4] sm:$0xf]
    %v202 = vld [vmem:[#allocation6 + $0x1f8] sm:$0xf]
    %v203 = vld [vmem:[#allocation6 + $0x1fc] sm:$0xf]
    %v332 = vunpack.c.l.b16 %v76
    %v333 = vunpack.c.l.b16 %v77
    %v334 = vunpack.c.l.b16 %v78
    %v335 = vunpack.c.l.b16 %v79
    %v336 = vunpack.c.l.b16 %v80
    %v337 = vunpack.c.l.b16 %v81
    %v338 = vunpack.c.l.b16 %v82
    %v339 = vunpack.c.l.b16 %v83
    %v340 = vunpack.c.l.b16 %v84
    %v341 = vunpack.c.l.b16 %v85
    %v342 = vunpack.c.l.b16 %v86
    %v343 = vunpack.c.l.b16 %v87
    %v344 = vunpack.c.l.b16 %v88
    %v345 = vunpack.c.l.b16 %v89
    %v346 = vunpack.c.l.b16 %v90
    %v347 = vunpack.c.l.b16 %v91
    %v348 = vunpack.c.l.b16 %v92
    %v349 = vunpack.c.l.b16 %v93
    %v350 = vunpack.c.l.b16 %v94
    %v351 = vunpack.c.l.b16 %v95
    %v352 = vunpack.c.l.b16 %v96
    %v353 = vunpack.c.l.b16 %v97
    %v354 = vunpack.c.l.b16 %v98
    %v355 = vunpack.c.l.b16 %v99
    %v356 = vunpack.c.l.b16 %v100
    %v357 = vunpack.c.l.b16 %v101
    %v358 = vunpack.c.l.b16 %v102
    %v359 = vunpack.c.l.b16 %v103
    %v360 = vunpack.c.l.b16 %v104
    %v361 = vunpack.c.l.b16 %v105
    %v362 = vunpack.c.l.b16 %v106
    %v363 = vunpack.c.l.b16 %v107
    %v364 = vunpack.c.l.b16 %v108
    %v365 = vunpack.c.l.b16 %v109
    %v366 = vunpack.c.l.b16 %v110
    %v367 = vunpack.c.l.b16 %v111
    %v368 = vunpack.c.l.b16 %v112
    %v369 = vunpack.c.l.b16 %v113
    %v370 = vunpack.c.l.b16 %v114
    %v371 = vunpack.c.l.b16 %v115
    %v372 = vunpack.c.l.b16 %v116
    %v373 = vunpack.c.l.b16 %v117
    %v374 = vunpack.c.l.b16 %v118
    %v375 = vunpack.c.l.b16 %v119
    %v376 = vunpack.c.l.b16 %v120
    %v377 = vunpack.c.l.b16 %v121
    %v378 = vunpack.c.l.b16 %v122
    %v379 = vunpack.c.l.b16 %v123
    %v380 = vunpack.c.l.b16 %v124
    %v381 = vunpack.c.l.b16 %v125
    %v382 = vunpack.c.l.b16 %v126
    %v383 = vunpack.c.l.b16 %v127
    %v384 = vunpack.c.l.b16 %v128
    %v385 = vunpack.c.l.b16 %v129
    %v386 = vunpack.c.l.b16 %v130
    %v387 = vunpack.c.l.b16 %v131
    %v388 = vunpack.c.l.b16 %v132
    %v389 = vunpack.c.l.b16 %v133
    %v390 = vunpack.c.l.b16 %v134
    %v391 = vunpack.c.l.b16 %v135
    %v392 = vunpack.c.l.b16 %v136
    %v393 = vunpack.c.l.b16 %v137
    %v394 = vunpack.c.l.b16 %v138
    %v395 = vunpack.c.l.b16 %v139
    %v396 = vunpack.c.l.b16 %v140
    %v397 = vunpack.c.l.b16 %v141
    %v398 = vunpack.c.l.b16 %v142
    %v399 = vunpack.c.l.b16 %v143
    %v400 = vunpack.c.l.b16 %v144
    %v401 = vunpack.c.l.b16 %v145
    %v402 = vunpack.c.l.b16 %v146
    %v403 = vunpack.c.l.b16 %v147
    %v404 = vunpack.c.l.b16 %v148
    %v405 = vunpack.c.l.b16 %v149
    %v406 = vunpack.c.l.b16 %v150
    %v407 = vunpack.c.l.b16 %v151
    %v408 = vunpack.c.l.b16 %v152
    %v409 = vunpack.c.l.b16 %v153
    %v410 = vunpack.c.l.b16 %v154
    %v411 = vunpack.c.l.b16 %v155
    %v412 = vunpack.c.l.b16 %v156
    %v413 = vunpack.c.l.b16 %v157
    %v414 = vunpack.c.l.b16 %v158
    %v415 = vunpack.c.l.b16 %v159
    %v416 = vunpack.c.l.b16 %v160
    %v417 = vunpack.c.l.b16 %v161
    %v418 = vunpack.c.l.b16 %v162
    %v419 = vunpack.c.l.b16 %v163
    %v420 = vunpack.c.l.b16 %v164
    %v421 = vunpack.c.l.b16 %v165
    %v422 = vunpack.c.l.b16 %v166
    %v423 = vunpack.c.l.b16 %v167
    %v424 = vunpack.c.l.b16 %v168
    %v425 = vunpack.c.l.b16 %v169
    %v426 = vunpack.c.l.b16 %v170
    %v427 = vunpack.c.l.b16 %v171
    %v428 = vunpack.c.l.b16 %v172
    %v429 = vunpack.c.l.b16 %v173
    %v430 = vunpack.c.l.b16 %v174
    %v431 = vunpack.c.l.b16 %v175
    %v432 = vunpack.c.l.b16 %v176
    %v433 = vunpack.c.l.b16 %v177
    %v434 = vunpack.c.l.b16 %v178
    %v435 = vunpack.c.l.b16 %v179
    %v436 = vunpack.c.l.b16 %v180
    %v437 = vunpack.c.l.b16 %v181
    %v438 = vunpack.c.l.b16 %v182
    %v439 = vunpack.c.l.b16 %v183
    %v440 = vunpack.c.l.b16 %v184
    %v441 = vunpack.c.l.b16 %v185
    %v442 = vunpack.c.l.b16 %v186
    %v443 = vunpack.c.l.b16 %v187
    %v444 = vunpack.c.l.b16 %v188
    %v445 = vunpack.c.l.b16 %v189
    %v446 = vunpack.c.l.b16 %v190
    %v447 = vunpack.c.l.b16 %v191
    %v448 = vunpack.c.l.b16 %v192
    %v449 = vunpack.c.l.b16 %v193
    %v450 = vunpack.c.l.b16 %v194
    %v451 = vunpack.c.l.b16 %v195
    %v452 = vunpack.c.l.b16 %v196
    %v453 = vunpack.c.l.b16 %v197
    %v454 = vunpack.c.l.b16 %v198
    %v455 = vunpack.c.l.b16 %v199
    %v456 = vunpack.c.l.b16 %v200
    %v457 = vunpack.c.l.b16 %v201
    %v458 = vunpack.c.l.b16 %v202
    %v459 = vunpack.c.l.b16 %v203
    %v460 = vpack.c.b16 %v333, %v332
    %v461 = vpack.c.b16 %v335, %v334
    %v462 = vpack.c.b16 %v337, %v336
    %v463 = vpack.c.b16 %v339, %v338
    %v464 = vpack.c.b16 %v341, %v340
    %v465 = vpack.c.b16 %v343, %v342
    %v466 = vpack.c.b16 %v345, %v344
    %v467 = vpack.c.b16 %v347, %v346
    %v468 = vpack.c.b16 %v349, %v348
    %v469 = vpack.c.b16 %v351, %v350
    %v470 = vpack.c.b16 %v353, %v352
    %v471 = vpack.c.b16 %v355, %v354
    %v472 = vpack.c.b16 %v357, %v356
    %v473 = vpack.c.b16 %v359, %v358
    %v474 = vpack.c.b16 %v361, %v360
    %v475 = vpack.c.b16 %v363, %v362
    %v476 = vpack.c.b16 %v365, %v364
    %v477 = vpack.c.b16 %v367, %v366
    %v478 = vpack.c.b16 %v369, %v368
    %v479 = vpack.c.b16 %v371, %v370
    %v480 = vpack.c.b16 %v373, %v372
    %v481 = vpack.c.b16 %v375, %v374
    %v482 = vpack.c.b16 %v377, %v376
    %v483 = vpack.c.b16 %v379, %v378
    %v484 = vpack.c.b16 %v381, %v380
    %v485 = vpack.c.b16 %v383, %v382
    %v486 = vpack.c.b16 %v385, %v384
    %v487 = vpack.c.b16 %v387, %v386
    %v488 = vpack.c.b16 %v389, %v388
    %v489 = vpack.c.b16 %v391, %v390
    %v490 = vpack.c.b16 %v393, %v392
    %v491 = vpack.c.b16 %v395, %v394
    %v492 = vpack.c.b16 %v397, %v396
    %v493 = vpack.c.b16 %v399, %v398
    %v494 = vpack.c.b16 %v401, %v400
    %v495 = vpack.c.b16 %v403, %v402
    %v496 = vpack.c.b16 %v405, %v404
    %v497 = vpack.c.b16 %v407, %v406
    %v498 = vpack.c.b16 %v409, %v408
    %v499 = vpack.c.b16 %v411, %v410
    %v500 = vpack.c.b16 %v413, %v412
    %v501 = vpack.c.b16 %v415, %v414
    %v502 = vpack.c.b16 %v417, %v416
    %v503 = vpack.c.b16 %v419, %v418
    %v504 = vpack.c.b16 %v421, %v420
    %v505 = vpack.c.b16 %v423, %v422
    %v506 = vpack.c.b16 %v425, %v424
    %v507 = vpack.c.b16 %v427, %v426
    %v508 = vpack.c.b16 %v429, %v428
    %v509 = vpack.c.b16 %v431, %v430
    %v510 = vpack.c.b16 %v433, %v432
    %v511 = vpack.c.b16 %v435, %v434
    %v512 = vpack.c.b16 %v437, %v436
    %v513 = vpack.c.b16 %v439, %v438
    %v514 = vpack.c.b16 %v441, %v440
    %v515 = vpack.c.b16 %v443, %v442
    %v516 = vpack.c.b16 %v445, %v444
    %v517 = vpack.c.b16 %v447, %v446
    %v518 = vpack.c.b16 %v449, %v448
    %v519 = vpack.c.b16 %v451, %v450
    %v520 = vpack.c.b16 %v453, %v452
    %v521 = vpack.c.b16 %v455, %v454
    %v522 = vpack.c.b16 %v457, %v456
    %v523 = vpack.c.b16 %v459, %v458
    %588 = vmatpush.bf16.msra.mxu0 %v467
    %589 = vmatpush.bf16.msra.mxu0 %v466
    %590 = vmatpush.bf16.msra.mxu0 %v465
    %591 = vmatpush.bf16.msra.mxu0 %v464
    %592 = vmatpush.bf16.msra.mxu0 %v463
    %593 = vmatpush.bf16.msra.mxu0 %v462
    %594 = vmatpush.bf16.msra.mxu0 %v461
    %595 = vmatpush.bf16.msra.mxu0 %v460
    %596 = vmatmul.bf16.gmra.mxu0 %v68
    %v597 = vpop.f32.mrf.mxu0
    %v598 = vadd.f32 0.0, %v597
    %v599 = vpop.f32.mrf.mxu0
    %600 = vdwg.mxu0
    %601 = vmatpush.bf16.msra.mxu0 %v475
    %602 = vmatpush.bf16.msra.mxu0 %v474
    %603 = vmatpush.bf16.msra.mxu0 %v473
    %604 = vmatpush.bf16.msra.mxu0 %v472
    %605 = vmatpush.bf16.msra.mxu0 %v471
    %606 = vmatpush.bf16.msra.mxu0 %v470
    %607 = vmatpush.bf16.msra.mxu0 %v469
    %608 = vmatpush.bf16.msra.mxu0 %v468
    %609 = vmatmul.bf16.gmra.mxu0 %v69
    %v610 = vpop.f32.mrf.mxu0
    %v611 = vadd.f32 %v598, %v610
    %v612 = vpop.f32.mrf.mxu0
    %613 = vdwg.mxu0
    %614 = vmatpush.bf16.msra.mxu0 %v483
    %615 = vmatpush.bf16.msra.mxu0 %v482
    %616 = vmatpush.bf16.msra.mxu0 %v481
    %617 = vmatpush.bf16.msra.mxu0 %v480
    %618 = vmatpush.bf16.msra.mxu0 %v479
    %619 = vmatpush.bf16.msra.mxu0 %v478
    %620 = vmatpush.bf16.msra.mxu0 %v477
    %621 = vmatpush.bf16.msra.mxu0 %v476
    %622 = vmatmul.bf16.gmra.mxu0 %v70
    %v623 = vpop.f32.mrf.mxu0
    %v624 = vadd.f32 %v611, %v623
    %v625 = vpop.f32.mrf.mxu0
    %626 = vdwg.mxu0
    %627 = vmatpush.bf16.msra.mxu0 %v491
    %628 = vmatpush.bf16.msra.mxu0 %v490
    %629 = vmatpush.bf16.msra.mxu0 %v489
    %630 = vmatpush.bf16.msra.mxu0 %v488
    %631 = vmatpush.bf16.msra.mxu0 %v487
    %632 = vmatpush.bf16.msra.mxu0 %v486
    %633 = vmatpush.bf16.msra.mxu0 %v485
    %634 = vmatpush.bf16.msra.mxu0 %v484
    %635 = vmatmul.bf16.gmra.mxu0 %v71
    %v636 = vpop.f32.mrf.mxu0
    %v637 = vadd.f32 %v624, %v636
    %v638 = vpop.f32.mrf.mxu0
    %639 = vdwg.mxu0
    %640 = vmatpush.bf16.msra.mxu0 %v499
    %641 = vmatpush.bf16.msra.mxu0 %v498
    %642 = vmatpush.bf16.msra.mxu0 %v497
    %643 = vmatpush.bf16.msra.mxu0 %v496
    %644 = vmatpush.bf16.msra.mxu0 %v495
    %645 = vmatpush.bf16.msra.mxu0 %v494
    %646 = vmatpush.bf16.msra.mxu0 %v493
    %647 = vmatpush.bf16.msra.mxu0 %v492
    %648 = vmatmul.bf16.gmra.mxu0 %v72
    %v649 = vpop.f32.mrf.mxu0
    %v650 = vadd.f32 %v637, %v649
    %v651 = vpop.f32.mrf.mxu0
    %652 = vdwg.mxu0
    %653 = vmatpush.bf16.msra.mxu0 %v507
    %654 = vmatpush.bf16.msra.mxu0 %v506
    %655 = vmatpush.bf16.msra.mxu0 %v505
    %656 = vmatpush.bf16.msra.mxu0 %v504
    %657 = vmatpush.bf16.msra.mxu0 %v503
    %658 = vmatpush.bf16.msra.mxu0 %v502
    %659 = vmatpush.bf16.msra.mxu0 %v501
    %660 = vmatpush.bf16.msra.mxu0 %v500
    %661 = vmatmul.bf16.gmra.mxu0 %v73
    %v662 = vpop.f32.mrf.mxu0
    %v663 = vadd.f32 %v650, %v662
    %v664 = vpop.f32.mrf.mxu0
    %665 = vdwg.mxu0
    %666 = vmatpush.bf16.msra.mxu0 %v515
    %667 = vmatpush.bf16.msra.mxu0 %v514
    %668 = vmatpush.bf16.msra.mxu0 %v513
    %669 = vmatpush.bf16.msra.mxu0 %v512
    %670 = vmatpush.bf16.msra.mxu0 %v511
    %671 = vmatpush.bf16.msra.mxu0 %v510
    %672 = vmatpush.bf16.msra.mxu0 %v509
    %673 = vmatpush.bf16.msra.mxu0 %v508
    %674 = vmatmul.bf16.gmra.mxu0 %v74
    %v675 = vpop.f32.mrf.mxu0
    %v676 = vadd.f32 %v663, %v675
    %v677 = vpop.f32.mrf.mxu0
    %678 = vdwg.mxu0
    %679 = vmatpush.bf16.msra.mxu0 %v523
    %680 = vmatpush.bf16.msra.mxu0 %v522
    %681 = vmatpush.bf16.msra.mxu0 %v521
    %682 = vmatpush.bf16.msra.mxu0 %v520
    %683 = vmatpush.bf16.msra.mxu0 %v519
    %684 = vmatpush.bf16.msra.mxu0 %v518
    %685 = vmatpush.bf16.msra.mxu0 %v517
    %686 = vmatpush.bf16.msra.mxu0 %v516
    %687 = vmatmul.bf16.gmra.mxu0 %v75
    %v688 = vpop.f32.mrf.mxu0
    %v689 = vadd.f32 %v676, %v688
    %v690 = vpop.f32.mrf.mxu0
    %691 = vdwg.mxu0
    %p692 = scmp.eq.s32.totalorder 0, 0
    // Predicated region
    $region26: #{tpu_custom_call.1} parent=1 // pred_check
      %p693 = pneg %p692
    $region27: #{tpu_custom_call.1} parent=1 // pred_check_branch
      %695 = sbr.rel (%p693) target = $region29
    $region28: #{tpu_custom_call.1} parent=1 // pred_region
      %696 = vst [vmem:[#allocation2] sm:$0xff] %v689
    $region29: #{tpu_custom_call.1} parent=1 // pred_fallthru
      _
    %p697 = scmp.gt.s32.totalorder 0, 0
    // Predicated region
    $region30: #{tpu_custom_call.1} parent=1 // pred_check
      %p698 = pneg %p697
    $region31: #{tpu_custom_call.1} parent=1 // pred_check_branch
      %700 = sbr.rel (%p698) target = $region33
    $region32: #{tpu_custom_call.1} parent=1 // pred_region
      %v701 = vld [vmem:[#allocation2] sm:$0xff]
      %v702 = vadd.f32 %v701, %v689
      %703 = vst [vmem:[#allocation2] sm:$0xff] %v702
    $region33: #{tpu_custom_call.1} parent=1 // pred_fallthru
      _
    // Predicated region
    $region34: #{tpu_custom_call.1} parent=1 // pred_check
      %p704 = pneg %p692
    $region35: #{tpu_custom_call.1} parent=1 // pred_check_branch
      %706 = sbr.rel (%p704) target = $region37
    $region36: #{tpu_custom_call.1} parent=1 // pred_region
      %v707 = vld [vmem:[#allocation2] sm:$0xff]
      %v708 = vpack.c.bf16 %v707, %v707
      %v709 = vld [vmem:[#allocation8] sm:$0xf]
      %v710 = vld [vmem:[#allocation8 + $0x4] sm:$0xf]
      %v711 = vld [vmem:[#allocation8 + $0x8] sm:$0xf]
      %v712 = vld [vmem:[#allocation8 + $0xc] sm:$0xf]
      %v713 = vld [vmem:[#allocation8 + $0x10] sm:$0xf]
      %v714 = vld [vmem:[#allocation8 + $0x14] sm:$0xf]
      %v715 = vld [vmem:[#allocation8 + $0x18] sm:$0xf]
      %v716 = vld [vmem:[#allocation8 + $0x1c] sm:$0xf]
      %v717 = vld [vmem:[#allocation8 + $0x20] sm:$0xf]
      %v718 = vld [vmem:[#allocation8 + $0x24] sm:$0xf]
      %v719 = vld [vmem:[#allocation8 + $0x28] sm:$0xf]
      %v720 = vld [vmem:[#allocation8 + $0x2c] sm:$0xf]
      %v721 = vld [vmem:[#allocation8 + $0x30] sm:$0xf]
      %v722 = vld [vmem:[#allocation8 + $0x34] sm:$0xf]
      %v723 = vld [vmem:[#allocation8 + $0x38] sm:$0xf]
      %v724 = vld [vmem:[#allocation8 + $0x3c] sm:$0xf]
      %v741 = vunpack.c.l.b16 %v709
      %v742 = vunpack.c.l.b16 %v710
      %v743 = vunpack.c.l.b16 %v711
      %v744 = vunpack.c.l.b16 %v712
      %v745 = vunpack.c.l.b16 %v713
      %v746 = vunpack.c.l.b16 %v714
      %v747 = vunpack.c.l.b16 %v715
      %v748 = vunpack.c.l.b16 %v716
      %v749 = vunpack.c.l.b16 %v717
      %v750 = vunpack.c.l.b16 %v718
      %v751 = vunpack.c.l.b16 %v719
      %v752 = vunpack.c.l.b16 %v720
      %v753 = vunpack.c.l.b16 %v721
      %v754 = vunpack.c.l.b16 %v722
      %v755 = vunpack.c.l.b16 %v723
      %v756 = vunpack.c.l.b16 %v724
      %v757 = vpack.c.b16 %v742, %v741
      %v758 = vpack.c.b16 %v744, %v743
      %v759 = vpack.c.b16 %v746, %v745
      %v760 = vpack.c.b16 %v748, %v747
      %v761 = vpack.c.b16 %v750, %v749
      %v762 = vpack.c.b16 %v752, %v751
      %v763 = vpack.c.b16 %v754, %v753
      %v764 = vpack.c.b16 %v756, %v755
      %773 = vmatpush.bf16.msra.mxu0 %v764
      %774 = vmatpush.bf16.msra.mxu0 %v763
      %775 = vmatpush.bf16.msra.mxu0 %v762
      %776 = vmatpush.bf16.msra.mxu0 %v761
      %777 = vmatpush.bf16.msra.mxu0 %v760
      %778 = vmatpush.bf16.msra.mxu0 %v759
      %779 = vmatpush.bf16.msra.mxu0 %v758
      %780 = vmatpush.bf16.msra.mxu0 %v757
      %781 = vmatmul.bf16.gmra.mxu0 %v708
      %v782 = vpop.f32.mrf.mxu0
      %v783 = vadd.f32 0.0, %v782
      %v784 = vpop.f32.mrf.mxu0
      %785 = vdwg.mxu0
      %v786 = vmul.f32 %v783, %v783
      %787 = vadd.xlane.f32.xlu0 %v786
      %v788 = vpop.xlane.xlu0 %787
      %v789 = vmax.f32 %v788, 1e-24
      %v790 = vrsqrt.pop %v789
      %v791 = vmul.f32 %v790, %v789
      %v792 = vmul.f32 %v791, %v790
      %v793 = vmul.f32 0.5, %v792
      %v794 = vsub.f32 1.5, %v793
      %v795 = vmul.f32 %v790, %v794
      %vm796 = vweird.f32 %v789
      %vm797 = vweird.f32 %v790
      %vm798 = vmor %vm796, %vm797
      %v799 = vsel %vm798, %v790, %v795
      %v800 = vmul.f32 %v783, %v799
      %801 = vst [vmem:[#allocation9] sm:$0xff] %v800
    $region37: #{tpu_custom_call.1} parent=1 // pred_fallthru
      _
    // Predicated region
    $region38: #{tpu_custom_call.1} parent=1 // pred_check
      _
    $region39: #{tpu_custom_call.1} parent=1 // pred_check_branch
      %803 = sbr.rel (0) target = $region41
    $region40: #{tpu_custom_call.1} parent=1 // pred_region
      %805 = vsyncadd [#allocation5], 0
      %s807 = sshll.u32 [#allocation9], 4
      %s808 = int_to_ptr.vmem [resolvable:$true] %s807
      %s809 = sshll.u32 %s3, 4
      %s810 = int_to_ptr.hbm [resolvable:$true] %s809
      %812 = dma.vmem_to_hbm [thread:$0]  %s808, 128, %s810, [#allocation5]
    $region41: #{tpu_custom_call.1} parent=1 // pred_fallthru
      _
    // Predicated region
    $region42: #{tpu_custom_call.1} parent=1 // pred_check
      _
    $region43: #{tpu_custom_call.1} parent=1 // pred_check_branch
      %814 = sbr.rel (0) target = $region45
    $region44: #{tpu_custom_call.1} parent=1 // pred_region
      %816 = dma.done [#allocation5], 128
    $region45: #{tpu_custom_call.1} parent=1 // pred_fallthru
      _
    %817 = vsyncpa [#allocation4], 1
    %818 = vsyncpa [#allocation7], 1
    %819 = vsyncpa [#allocation5], 1

</llo_original>
